<compile_context>
chip_gen: v5e
topology: v5e:2x2
jax: 0.10.0
libtpu: 0.0.40
codegen_flags: <defaults>
</compile_context>

<pallas_src>
import jax
import jax.numpy as jnp
import numpy as np
from jax import lax
from jax.experimental import pallas as pl
from jax.experimental.pallas import tpu as pltpu


# ---------------------------------------------------------------------------
# small helpers
# ---------------------------------------------------------------------------
def _vmem_limit_bytes():
    # Explicit VMEM budget (leave headroom below physical capacity; 64 MiB on
    # v7x, 128 MiB on v5e/v6e).  Falls back to the compiler default if the
    # query is unavailable.
    try:
        cap = pltpu.get_tpu_info().vmem_capacity_bytes
        return min(int(cap) * 3 // 4, 96 * 1024 * 1024)
    except Exception:
        return None


def _compiler_params(dimension_semantics):
    kwargs = dict(dimension_semantics=dimension_semantics)
    limit = _vmem_limit_bytes()
    if limit is not None:
        kwargs["vmem_limit_bytes"] = limit
    return pltpu.CompilerParams(**kwargs)


def _stable_softplus(x):
    # log1p(exp(x)) rewritten to avoid overflow for large x and stay finite for
    # very negative x (same value in the well-behaved range, robust elsewhere).
    return jnp.maximum(x, 0.0) + jnp.log1p(jnp.exp(-jnp.abs(x)))


def _erf(x):
    # Abramowitz & Stegun 7.1.26 (max abs err ~1.5e-7) built from
    # exp/mul/add + one f32 divide (EUP recip + Newton; free under MXU slack).
    a1 = 0.254829592
    a2 = -0.284496736
    a3 = 1.421413741
    a4 = -1.453152027
    a5 = 1.061405429
    p = 0.3275911
    sign = jnp.where(x < 0.0, -1.0, 1.0)
    ax = jnp.abs(x)
    t = 1.0 / (1.0 + p * ax)
    poly = ((((a5 * t + a4) * t + a3) * t + a2) * t + a1) * t
    return sign * (1.0 - poly * jnp.exp(-ax * ax))


def _gelu_exact(x):
    # PyTorch nn.GELU() default (approximate='none'): 0.5*x*(1+erf(x/sqrt(2)))
    return 0.5 * x * (1.0 + _erf(x * 0.7071067811865476))


# ---------------------------------------------------------------------------
# Kernel 1: Bayesian weight sampling + KL reduction (per LinearBayes layer)
# ---------------------------------------------------------------------------
def _weight_kl_kernel(wmu_ref, wrho_ref, weps_ref, bmu_ref, brho_ref, beps_ref,
                      w_ref, b_ref, kl_ref, kl_acc):
    step = pl.program_id(0)

    @pl.when(step == 0)
    def _():
        kl_acc[0] = jnp.float32(0.0)
        # Bias is tiny: sample it once on the first grid step.
        bsig = _stable_softplus(brho_ref[...])
        b_ref[...] = bmu_ref[...] + beps_ref[...] * bsig

    wmu = wmu_ref[...]
    wrho = wrho_ref[...]
    wsig = _stable_softplus(wrho)                  # softplus(W_rho)
    w_ref[...] = wmu + weps_ref[...] * wsig        # reparameterized weight tile

    # KL exactly as LinearBayes.kl_loss(): prior_mu=0, prior_sigma=1, W only.
    # log(sigma) guarded against softplus underflow (sigma -> exp(rho)).
    log_wsig = jnp.where(wrho < -20.0, wrho, jnp.log(wsig))
    kl_acc[0] += jnp.sum(-log_wsig + 0.5 * (wsig * wsig + wmu * wmu) - 0.5)

    @pl.when(step == pl.num_programs(0) - 1)
    def _():
        kl_ref[0, 0] = kl_acc[0]


def _pick_row_tile(out_f, in_f):
    # Largest candidate that (a) divides out_features exactly (so no padded
    # rows pollute the KL sum) and (b) keeps the ~8 resident row-tile copies
    # (3 inputs + 1 output, double-buffered) of (tr, in_f) f32 under ~16 MiB.
    budget_tile_bytes = 2 * 1024 * 1024
    for tr in (512, 256, 128, 64, 32, 16, 8):
        if out_f % tr == 0 and tr * in_f * 4 <= budget_tile_bytes:
            return tr
    return out_f


def sample_weight_and_kl(wmu, wrho, weps, bmu, brho, beps):
    """Reparameterized (W, bias) sampling + KL(W) for one LinearBayes layer.

    W is produced in the PyTorch (out_features, in_features) layout; the MLP
    kernel contracts on in_features directly, so no transpose is ever needed.
    """
    out_f, in_f = wmu.shape
    tr = _pick_row_tile(out_f, in_f)
    grid = (pl.cdiv(out_f, tr),)

    w, b, kl = pl.pallas_call(
        _weight_kl_kernel,
        out_shape=(
            jax.ShapeDtypeStruct((out_f, in_f), jnp.float32),
            jax.ShapeDtypeStruct((1, out_f), jnp.float32),
            jax.ShapeDtypeStruct((1, 1), jnp.float32),
        ),
        grid=grid,
        in_specs=[
            pl.BlockSpec((tr, in_f), lambda i: (i, 0)),   # W_mu rows
            pl.BlockSpec((tr, in_f), lambda i: (i, 0)),   # W_rho rows
            pl.BlockSpec((tr, in_f), lambda i: (i, 0)),   # W_eps rows
            pl.BlockSpec((1, out_f), lambda i: (0, 0)),   # bias_mu
            pl.BlockSpec((1, out_f), lambda i: (0, 0)),   # bias_rho
            pl.BlockSpec((1, out_f), lambda i: (0, 0)),   # bias_eps
        ],
        out_specs=(
            pl.BlockSpec((tr, in_f), lambda i: (i, 0)),   # sampled W rows
            pl.BlockSpec((1, out_f), lambda i: (0, 0)),   # sampled bias
            pl.BlockSpec((1, 1), lambda i: (0, 0),
                         memory_space=pltpu.MemorySpace.SMEM),  # scalar KL
        ),
        scratch_shapes=[pltpu.SMEM((1,), jnp.float32)],
        compiler_params=_compiler_params(("arbitrary",)),
    )(wmu, wrho, weps, bmu, brho, beps)
    return w, b, kl[0, 0]


# ---------------------------------------------------------------------------
# Kernel 2: fused MLP block  out = gelu(x @ W1^T + b1) @ W2^T + b2 + x
# grid = (token tiles [parallel], hidden-dim tiles [arbitrary, reduction last])
# ---------------------------------------------------------------------------
def _bayes_mlp_kernel(x_ref, w1_ref, b1_ref, w2_ref, b2_ref, o_ref, acc_ref):
    k = pl.program_id(1)

    @pl.when(k == 0)
    def _():
        acc_ref[...] = jnp.zeros_like(acc_ref)

    x = x_ref[...]                                              # (tm, D)
    # h_tile = x @ W1[k-tile].T + b1[k-tile]   (contract on in_features=D)
    h = lax.dot_general(x, w1_ref[...], (((1,), (1,)), ((), ())),
                        preferred_element_type=jnp.float32) + b1_ref[...]
    h = _gelu_exact(h)                                          # (tm, th)
    # acc += gelu(h_tile) @ W2[:, k-tile].T    (contract on the hidden tile)
    acc_ref[...] += lax.dot_general(h, w2_ref[...], (((1,), (1,)), ((), ())),
                                    preferred_element_type=jnp.float32)

    @pl.when(k == pl.num_programs(1) - 1)
    def _():
        # Fold bias2 + residual into one pass over the f32 accumulator.
        o_ref[...] = (acc_ref[...] + b2_ref[...] + x).astype(o_ref.dtype)


def _pick_token_tile(m):
    # Largest row tile that amortizes per-grid-step overhead and fills the
    # MXU; a full-extent block is always layout-legal, so small M is 1 block.
    return m if m <= 256 else 256


def _pick_hidden_tile(h, d):
    # Largest hidden tile that divides H exactly and keeps the double-buffered
    # W1+W2 tile footprint ((th,D)+(D,th), f32, x2 buffers) under ~8 MiB, so
    # the pipeline stays well inside v7x's 64 MiB VMEM even at large D.
    budget = 8 * 1024 * 1024
    for th in (2048, 1024, 512, 256, 128):
        if h % th == 0 and 2 * 2 * th * d * 4 <= budget:
            return th
    return h


def mlp_forward(x2d, w1, b1, w2, b2):
    """out = gelu(x @ W1^T + b1) @ W2^T + b2 + x, W in PyTorch (out,in) layout."""
    M, D = x2d.shape
    H = w1.shape[0]
    tm = _pick_token_tile(M)
    th = _pick_hidden_tile(H, D)
    grid = (pl.cdiv(M, tm), pl.cdiv(H, th))

    # TODO(synk): single-buffer the grid-invariant b2 block
    # (pipeline_mode=pl.Buffered(1)) and optionally feed bf16 MXU inputs on
    # v6e/v7x; both halve weight VMEM/HBM bytes when accuracy allows.
    return pl.pallas_call(
        _bayes_mlp_kernel,
        out_shape=jax.ShapeDtypeStruct((M, D), x2d.dtype),
        grid=grid,
        in_specs=[
            pl.BlockSpec((tm, D), lambda i, k: (i, 0)),   # x row tile
            pl.BlockSpec((th, D), lambda i, k: (k, 0)),   # W1 rows (hidden tile)
            pl.BlockSpec((1, th), lambda i, k: (0, k)),   # b1 tile
            pl.BlockSpec((D, th), lambda i, k: (0, k)),   # W2 cols (hidden tile)
            pl.BlockSpec((1, D), lambda i, k: (0, 0)),    # b2
        ],
        out_specs=pl.BlockSpec((tm, D), lambda i, k: (i, 0)),
        scratch_shapes=[pltpu.VMEM((tm, D), jnp.float32)],
        compiler_params=_compiler_params(("parallel", "arbitrary")),
    )(x2d, w1, b1, w2, b2)


# ---------------------------------------------------------------------------
# BayesBlock forward (glue in plain JAX; hot paths in the kernels above)
# ---------------------------------------------------------------------------
def bayes_block_forward(x, params, eps, stochastic=True):
    B, N, D = x.shape
    if stochastic:
        w1, b1, kl1 = sample_weight_and_kl(
            params["fc1_Wmu"], params["fc1_Wrho"], eps["fc1_W"],
            params["fc1_bmu"][None, :], params["fc1_brho"][None, :],
            eps["fc1_b"][None, :])
        w2, b2, kl2 = sample_weight_and_kl(
            params["fc2_Wmu"], params["fc2_Wrho"], eps["fc2_W"],
            params["fc2_bmu"][None, :], params["fc2_brho"][None, :],
            eps["fc2_b"][None, :])
        kl_total = kl1 + kl2
    else:
        w1, b1 = params["fc1_Wmu"], params["fc1_bmu"][None, :]
        w2, b2 = params["fc2_Wmu"], params["fc2_bmu"][None, :]
        kl_total = jnp.float32(0.0)

    x2d = x.reshape(B * N, D)
    out = mlp_forward(x2d, w1, b1, w2, b2)   # no host-side transposes
    return out.reshape(B, N, D), kl_total


# ---------------------------------------------------------------------------
# pure-JAX reference (for a sanity check against the kernels)
# ---------------------------------------------------------------------------
def _reference_forward(x, params, eps):
    sp = jax.nn.softplus
    w1s = sp(params["fc1_Wrho"])
    w1 = params["fc1_Wmu"] + eps["fc1_W"] * w1s
    b1 = params["fc1_bmu"] + eps["fc1_b"] * sp(params["fc1_brho"])
    w2s = sp(params["fc2_Wrho"])
    w2 = params["fc2_Wmu"] + eps["fc2_W"] * w2s
    b2 = params["fc2_bmu"] + eps["fc2_b"] * sp(params["fc2_brho"])

    def kl(mu, sig):
        return jnp.sum(-jnp.log(sig) + 0.5 * (sig * sig + mu * mu) - 0.5)

    kl_total = kl(params["fc1_Wmu"], w1s) + kl(params["fc2_Wmu"], w2s)

    def gelu(v):
        return 0.5 * v * (1.0 + jax.scipy.special.erf(v * 0.7071067811865476))

    h = gelu(x @ w1.T + b1)
    y = h @ w2.T + b2 + x
    return y, kl_total


def _reference_deterministic(x, params):
    def gelu(v):
        return 0.5 * v * (1.0 + jax.scipy.special.erf(v * 0.7071067811865476))
    h = gelu(x @ params["fc1_Wmu"].T + params["fc1_bmu"])
    return h @ params["fc2_Wmu"].T + params["fc2_bmu"] + x


# ---------------------------------------------------------------------------
# deterministic test-input construction
# ---------------------------------------------------------------------------
def _make_case(key, B, N, D, H):
    ks = jax.random.split(key, 13)
    # LinearBayes.reset_parameters(): mu ~ N(0, 0.1), rho ~ N(-3, 0.1)
    params = {
        "fc1_Wmu":  0.0 + 0.1 * jax.random.normal(ks[0], (H, D), jnp.float32),
        "fc1_Wrho": -3.0 + 0.1 * jax.random.normal(ks[1], (H, D), jnp.float32),
        "fc1_bmu":  0.0 + 0.1 * jax.random.normal(ks[2], (H,), jnp.float32),
        "fc1_brho": -3.0 + 0.1 * jax.random.normal(ks[3], (H,), jnp.float32),
        "fc2_Wmu":  0.0 + 0.1 * jax.random.normal(ks[4], (D, H), jnp.float32),
        "fc2_Wrho": -3.0 + 0.1 * jax.random.normal(ks[5], (D, H), jnp.float32),
        "fc2_bmu":  0.0 + 0.1 * jax.random.normal(ks[6], (D,), jnp.float32),
        "fc2_brho": -3.0 + 0.1 * jax.random.normal(ks[7], (D,), jnp.float32),
    }
    # Reparameterization noise (torch .normal_() replaced by deterministic
    # jax.random draws made outside the kernels).
    eps = {
        "fc1_W": jax.random.normal(ks[8], (H, D), jnp.float32),
        "fc1_b": jax.random.normal(ks[9], (H,), jnp.float32),
        "fc2_W": jax.random.normal(ks[10], (D, H), jnp.float32),
        "fc2_b": jax.random.normal(ks[11], (D,), jnp.float32),
    }
    x = jax.random.normal(ks[12], (B, N, D), jnp.float32)
    return params, eps, x


# ---------------------------------------------------------------------------
# main
# ---------------------------------------------------------------------------
if __name__ == "__main__":
    root = jax.random.PRNGKey(0)
    k_tiny, k_tiled = jax.random.split(root, 2)

    # ---- Case 1: tiny shapes (single-block path), tight reference check ----
    B, N, D, H = 2, 8, 16, 32
    params, eps, x = _make_case(k_tiny, B, N, D, H)

    out, kl_total = bayes_block_forward(x, params, eps, stochastic=True)
    out = jax.block_until_ready(out)
    kl_total = jax.block_until_ready(kl_total)

    assert out.shape == (B, N, D)
    assert np.all(np.isfinite(np.asarray(out)))
    assert np.isfinite(float(kl_total))

    ref_out, ref_kl = _reference_forward(x, params, eps)
    np.testing.assert_allclose(np.asarray(out), np.asarray(ref_out),
                               rtol=2e-2, atol=2e-2)
    np.testing.assert_allclose(float(kl_total), float(ref_kl), rtol=1e-3)

    # deterministic (stochastic=False) path: mean weights, zero KL
    det_out, det_kl = bayes_block_forward(x, params, eps, stochastic=False)
    det_out = jax.block_until_ready(det_out)
    assert float(det_kl) == 0.0
    np.testing.assert_allclose(np.asarray(det_out),
                               np.asarray(_reference_deterministic(x, params)),
                               rtol=2e-2, atol=2e-2)

    # ---- Case 2: tiled shapes (multi-step token/hidden/row grids) ----------
    # Exercises the VMEM reduction accumulator, the SMEM KL accumulator across
    # grid steps, and the partial-block machinery at realistic tile counts.
    B2, N2, D2, H2 = 2, 256, 512, 2048
    params2, eps2, x2 = _make_case(k_tiled, B2, N2, D2, H2)

    out2, kl2 = bayes_block_forward(x2, params2, eps2, stochastic=True)
    out2 = jax.block_until_ready(out2)
    kl2 = jax.block_until_ready(kl2)

    assert out2.shape == (B2, N2, D2)
    assert np.all(np.isfinite(np.asarray(out2)))

    ref_out2, ref_kl2 = _reference_forward(x2, params2, eps2)
    np.testing.assert_allclose(float(kl2), float(ref_kl2), rtol=1e-3)
    # Both the kernel and the XLA reference run f32 matmuls through bf16 MXU
    # passes with different accumulation orders, so an element-wise allclose at
    # tight atol would be flaky at K=2048; a norm-relative bound still catches
    # any tiling/indexing bug (which would produce an O(1) relative error).
    d = np.asarray(out2) - np.asarray(ref_out2)
    rel = np.linalg.norm(d) / np.linalg.norm(np.asarray(ref_out2))
    assert rel < 3e-2, f"tiled-case relative Frobenius error too large: {rel}"

    print("KERNEL_OK")
</pallas_src>

<mosaic_0001>
module attributes {stable_mosaic.version = 11 : i64} {
  func.func @_weight_kl_kernel(%arg0: i32, %arg1: memref<32x16xf32, #tpu.memory_space<vmem>>, %arg2: memref<32x16xf32, #tpu.memory_space<vmem>>, %arg3: memref<32x16xf32, #tpu.memory_space<vmem>>, %arg4: memref<1x32xf32, #tpu.memory_space<vmem>>, %arg5: memref<1x32xf32, #tpu.memory_space<vmem>>, %arg6: memref<1x32xf32, #tpu.memory_space<vmem>>, %arg7: memref<32x16xf32, #tpu.memory_space<vmem>>, %arg8: memref<1x32xf32, #tpu.memory_space<vmem>>, %arg9: memref<1x1xf32, #tpu.memory_space<smem>>, %arg10: memref<1xf32, #tpu.memory_space<smem>>) attributes {dimension_semantics = [#tpu.dimension_semantics<arbitrary>], iteration_bounds = array<i64: 1>, scalar_prefetch = 0 : i64, scratch_operands = 1 : i64, tpu.core_type = #tpu.core_type<tc>, window_params = [{transform_indices = @transform_0, window_bounds = array<i64: 32, 16>}, {transform_indices = @transform_1, window_bounds = array<i64: 32, 16>}, {transform_indices = @transform_2, window_bounds = array<i64: 32, 16>}, {pipeline_mode = #tpu.pipeline_mode<synchronous>, transform_indices = @transform_3, window_bounds = array<i64: 1, 32>}, {pipeline_mode = #tpu.pipeline_mode<synchronous>, transform_indices = @transform_4, window_bounds = array<i64: 1, 32>}, {pipeline_mode = #tpu.pipeline_mode<synchronous>, transform_indices = @transform_5, window_bounds = array<i64: 1, 32>}, {transform_indices = @transform_6, window_bounds = array<i64: 32, 16>}, {pipeline_mode = #tpu.pipeline_mode<synchronous>, transform_indices = @transform_7, window_bounds = array<i64: 1, 32>}, {transform_indices = @transform_8, window_bounds = array<i64: 1, 1>}]} {
    %c0_i32 = arith.constant 0 : i32
    %0 = arith.cmpi eq, %arg0, %c0_i32 : i32
    %1 = arith.extui %0 : i1 to i32
    %c0_i32_0 = arith.constant 0 : i32
    %2 = arith.cmpi ne, %1, %c0_i32_0 : i32
    scf.if %2 {
      %cst_18 = arith.constant 0.000000e+00 : f32
      %c0_19 = arith.constant 0 : index
      %41 = memref.load %arg10[%c0_19] : memref<1xf32, #tpu.memory_space<smem>>
      memref.store %cst_18, %arg10[%c0_19] : memref<1xf32, #tpu.memory_space<smem>>
      %c0_20 = arith.constant 0 : index
      %c0_21 = arith.constant 0 : index
      %42 = vector.load %arg5[%c0_20, %c0_21] : memref<1x32xf32, #tpu.memory_space<vmem>>, vector<1x32xf32>
      %cst_22 = arith.constant 0.000000e+00 : f32
      %43 = vector.broadcast %cst_22 : f32 to vector<1x32xf32>
      %44 = arith.maximumf %42, %43 : vector<1x32xf32>
      %45 = math.absf %42 : vector<1x32xf32>
      %cst_23 = arith.constant 0.000000e+00 : f32
      %46 = vector.broadcast %cst_23 : f32 to vector<1x32xf32>
      %47 = arith.subf %46, %45 : vector<1x32xf32>
      %48 = math.exp %47 : vector<1x32xf32>
      %49 = math.log1p %48 : vector<1x32xf32>
      %50 = arith.addf %44, %49 : vector<1x32xf32>
      %c0_24 = arith.constant 0 : index
      %c0_25 = arith.constant 0 : index
      %51 = vector.load %arg4[%c0_24, %c0_25] : memref<1x32xf32, #tpu.memory_space<vmem>>, vector<1x32xf32>
      %c0_26 = arith.constant 0 : index
      %c0_27 = arith.constant 0 : index
      %52 = vector.load %arg6[%c0_26, %c0_27] : memref<1x32xf32, #tpu.memory_space<vmem>>, vector<1x32xf32>
      %53 = arith.mulf %52, %50 : vector<1x32xf32>
      %54 = arith.addf %51, %53 : vector<1x32xf32>
      %c0_28 = arith.constant 0 : index
      %c0_29 = arith.constant 0 : index
      %55 = vector.load %arg8[%c0_28, %c0_29] : memref<1x32xf32, #tpu.memory_space<vmem>>, vector<1x32xf32>
      tpu.vector_store %arg8[%c0_28, %c0_29], %54 {strides = array<i32>} : memref<1x32xf32, #tpu.memory_space<vmem>>, vector<1x32xf32>,
    } else {
    }
    %c0 = arith.constant 0 : index
    %c0_1 = arith.constant 0 : index
    %3 = vector.load %arg1[%c0, %c0_1] : memref<32x16xf32, #tpu.memory_space<vmem>>, vector<32x16xf32>
    %c0_2 = arith.constant 0 : index
    %c0_3 = arith.constant 0 : index
    %4 = vector.load %arg2[%c0_2, %c0_3] : memref<32x16xf32, #tpu.memory_space<vmem>>, vector<32x16xf32>
    %cst = arith.constant 0.000000e+00 : f32
    %5 = vector.broadcast %cst : f32 to vector<32x16xf32>
    %6 = arith.maximumf %4, %5 : vector<32x16xf32>
    %7 = math.absf %4 : vector<32x16xf32>
    %cst_4 = arith.constant 0.000000e+00 : f32
    %8 = vector.broadcast %cst_4 : f32 to vector<32x16xf32>
    %9 = arith.subf %8, %7 : vector<32x16xf32>
    %10 = math.exp %9 : vector<32x16xf32>
    %11 = math.log1p %10 : vector<32x16xf32>
    %12 = arith.addf %6, %11 : vector<32x16xf32>
    %c0_5 = arith.constant 0 : index
    %c0_6 = arith.constant 0 : index
    %13 = vector.load %arg3[%c0_5, %c0_6] : memref<32x16xf32, #tpu.memory_space<vmem>>, vector<32x16xf32>
    %14 = arith.mulf %13, %12 : vector<32x16xf32>
    %15 = arith.addf %3, %14 : vector<32x16xf32>
    %c0_7 = arith.constant 0 : index
    %c0_8 = arith.constant 0 : index
    %16 = vector.load %arg7[%c0_7, %c0_8] : memref<32x16xf32, #tpu.memory_space<vmem>>, vector<32x16xf32>
    tpu.vector_store %arg7[%c0_7, %c0_8], %15 {strides = array<i32>} : memref<32x16xf32, #tpu.memory_space<vmem>>, vector<32x16xf32>,
    %cst_9 = arith.constant -2.000000e+01 : f32
    %17 = vector.broadcast %cst_9 : f32 to vector<32x16xf32>
    %18 = arith.cmpf olt, %4, %17 : vector<32x16xf32>
    %19 = math.log %12 : vector<32x16xf32>
    %20 = arith.select %18, %4, %19 : vector<32x16xi1>, vector<32x16xf32>
    %c0_10 = arith.constant 0 : index
    %21 = memref.load %arg10[%c0_10] : memref<1xf32, #tpu.memory_space<smem>>
    %cst_11 = arith.constant 0.000000e+00 : f32
    %22 = vector.broadcast %cst_11 : f32 to vector<32x16xf32>
    %23 = arith.subf %22, %20 : vector<32x16xf32>
    %24 = arith.mulf %12, %12 : vector<32x16xf32>
    %25 = arith.mulf %3, %3 : vector<32x16xf32>
    %26 = arith.addf %24, %25 : vector<32x16xf32>
    %cst_12 = arith.constant 5.000000e-01 : f32
    %27 = vector.broadcast %cst_12 : f32 to vector<32x16xf32>
    %28 = arith.mulf %27, %26 : vector<32x16xf32>
    %29 = arith.addf %23, %28 : vector<32x16xf32>
    %cst_13 = arith.constant 5.000000e-01 : f32
    %30 = vector.broadcast %cst_13 : f32 to vector<32x16xf32>
    %31 = arith.subf %29, %30 : vector<32x16xf32>
    %32 = vector.shape_cast %31 : vector<32x16xf32> to vector<1x32x16xf32>
    %cst_14 = arith.constant dense<0.000000e+00> : vector<1xf32>
    %33 = vector.multi_reduction <add>, %32, %cst_14 [1, 2] : vector<1x32x16xf32> to vector<1xf32>
    %34 = vector.shape_cast %33 : vector<1xf32> to vector<1x1x1xf32>
    %35 = vector.extract %34[0, 0, 0] : f32 from vector<1x1x1xf32>
    %36 = arith.addf %21, %35 : f32
    %c0_15 = arith.constant 0 : index
    %37 = memref.load %arg10[%c0_15] : memref<1xf32, #tpu.memory_space<smem>>
    memref.store %36, %arg10[%c0_15] : memref<1xf32, #tpu.memory_space<smem>>
    %c0_i32_16 = arith.constant 0 : i32
    %38 = arith.cmpi eq, %arg0, %c0_i32_16 : i32
    %39 = arith.extui %38 : i1 to i32
    %c0_i32_17 = arith.constant 0 : i32
    %40 = arith.cmpi ne, %39, %c0_i32_17 : i32
    scf.if %40 {
      %c0_18 = arith.constant 0 : index
      %41 = memref.load %arg10[%c0_18] : memref<1xf32, #tpu.memory_space<smem>>
      %c0_19 = arith.constant 0 : index
      %c0_20 = arith.constant 0 : index
      %42 = memref.load %arg9[%c0_19, %c0_20] : memref<1x1xf32, #tpu.memory_space<smem>>
      memref.store %41, %arg9[%c0_19, %c0_20] : memref<1x1xf32, #tpu.memory_space<smem>>
    } else {
    }
    return
  }
  func.func @transform_0(%arg0: i32) -> (i32, i32) {
    %c0_i32 = arith.constant 0 : i32
    %c0_i32_0 = arith.constant 0 : i32
    return %arg0, %c0_i32 : i32, i32
  }
  func.func @transform_1(%arg0: i32) -> (i32, i32) {
    %c0_i32 = arith.constant 0 : i32
    %c0_i32_0 = arith.constant 0 : i32
    return %arg0, %c0_i32 : i32, i32
  }
  func.func @transform_2(%arg0: i32) -> (i32, i32) {
    %c0_i32 = arith.constant 0 : i32
    %c0_i32_0 = arith.constant 0 : i32
    return %arg0, %c0_i32 : i32, i32
  }
  func.func @transform_3(%arg0: i32) -> (i32, i32) {
    %c0_i32 = arith.constant 0 : i32
    %c0_i32_0 = arith.constant 0 : i32
    %c0_i32_1 = arith.constant 0 : i32
    return %c0_i32, %c0_i32_0 : i32, i32
  }
  func.func @transform_4(%arg0: i32) -> (i32, i32) {
    %c0_i32 = arith.constant 0 : i32
    %c0_i32_0 = arith.constant 0 : i32
    %c0_i32_1 = arith.constant 0 : i32
    return %c0_i32, %c0_i32_0 : i32, i32
  }
  func.func @transform_5(%arg0: i32) -> (i32, i32) {
    %c0_i32 = arith.constant 0 : i32
    %c0_i32_0 = arith.constant 0 : i32
    %c0_i32_1 = arith.constant 0 : i32
    return %c0_i32, %c0_i32_0 : i32, i32
  }
  func.func @transform_6(%arg0: i32) -> (i32, i32) {
    %c0_i32 = arith.constant 0 : i32
    %c0_i32_0 = arith.constant 0 : i32
    return %arg0, %c0_i32 : i32, i32
  }
  func.func @transform_7(%arg0: i32) -> (i32, i32) {
    %c0_i32 = arith.constant 0 : i32
    %c0_i32_0 = arith.constant 0 : i32
    %c0_i32_1 = arith.constant 0 : i32
    return %c0_i32, %c0_i32_0 : i32, i32
  }
  func.func @transform_8(%arg0: i32) -> (i32, i32) {
    %c0_i32 = arith.constant 0 : i32
    %c0_i32_0 = arith.constant 0 : i32
    %c0_i32_1 = arith.constant 0 : i32
    return %c0_i32, %c0_i32_0 : i32, i32
  }
}

</mosaic_0001>

<llo_original>
// kernel: tpu_custom_call.1
$region0: #{tpu_custom_call.1}
  #allocation0 [shape = 'u32[]', space=smem, size = 0x4, offset = 0x4, fixed_abs, tag = 'smem constant byte address 0x4 - core index']
  #allocation1 [shape = 'u32[72,128]{1,0:T(1,128)}', space=vmem, size = 0x9000, scoped, tag = 'internal scratch']
  #allocation2 [shape = 'f32[1]{0:T(128)}', space=smem, size = 0x200, scoped, tag = 'scratch operand']
  %s0 = inlined_call_operand.vmem [shape: f32[32,16], index: 0, kind: input, shape index: {}]
  %s1 = inlined_call_operand.vmem [shape: f32[32,16], index: 1, kind: input, shape index: {}]
  %s2 = inlined_call_operand.vmem [shape: f32[32,16], index: 2, kind: input, shape index: {}]
  %s3 = inlined_call_operand.vmem [shape: f32[1,32], index: 3, kind: input, shape index: {}]
  %s4 = inlined_call_operand.vmem [shape: f32[1,32], index: 4, kind: input, shape index: {}]
  %s5 = inlined_call_operand.vmem [shape: f32[1,32], index: 5, kind: input, shape index: {}]
  %s6 = inlined_call_operand.vmem [shape: f32[32,16], index: 6, kind: output, shape index: {0}]
  %s7 = inlined_call_operand.hbm [shape: f32[1,32], index: 7, kind: output, shape index: {1}]
  %s8 = inlined_call_operand.hbm [shape: f32[1,1], index: 8, kind: output, shape index: {2}]
  %9 = xla_tuple %s6, %s7, %s8
  %s10 = sld [smem:[#allocation0]]
  $region58: #{tpu_custom_call.1} parent=0
    _
  %s12 = ssub.s32 1, %s10
  %s13 = scalar_select 0, %s12, %s10
  $region1: #{tpu_custom_call.1} parent=0
    #allocation3 [shape = 'u8[512]{0}', space=vmem, size = 0x400, scoped, tag = 'output window, operand 1, single buffered']
    #allocation4 [shape = 's32[1]{0}', space=sflag, size = 0x4, scoped, tag = 'scoped memory for tpu_custom_call.1']
    #allocation5 [shape = 's32[1]{0}', space=sflag, size = 0x4, scoped, tag = 'scoped memory for tpu_custom_call.1']
    #allocation6 [shape = 'u8[512]{0}', space=smem, size = 0x200, scoped, tag = 'output window, operand 2, single buffered']
    %14 = vsyncpa [#allocation4], 0
    %15 = vsyncpa [#allocation5], 0
    // Predicated region
    $region2: #{tpu_custom_call.1} parent=1 // pred_check
      _
    $region3: #{tpu_custom_call.1} parent=1 // pred_check_branch
      %17 = sbr.rel (0) target = $region5
    $region4: #{tpu_custom_call.1} parent=1 // pred_region
      _
    $region5: #{tpu_custom_call.1} parent=1 // pred_fallthru
      _
    // Predicated region
    $region6: #{tpu_custom_call.1} parent=1 // pred_check
      _
    $region7: #{tpu_custom_call.1} parent=1 // pred_check_branch
      %19 = sbr.rel (0) target = $region9
    $region8: #{tpu_custom_call.1} parent=1 // pred_region
      _
    $region9: #{tpu_custom_call.1} parent=1 // pred_fallthru
      _
    // Predicated region
    $region10: #{tpu_custom_call.1} parent=1 // pred_check
      _
    $region11: #{tpu_custom_call.1} parent=1 // pred_check_branch
      %21 = sbr.rel (0) target = $region13
    $region12: #{tpu_custom_call.1} parent=1 // pred_region
      _
    $region13: #{tpu_custom_call.1} parent=1 // pred_fallthru
      _
    // Predicated region
    $region14: #{tpu_custom_call.1} parent=1 // pred_check
      _
    $region15: #{tpu_custom_call.1} parent=1 // pred_check_branch
      %23 = sbr.rel (0) target = $region17
    $region16: #{tpu_custom_call.1} parent=1 // pred_region
      _
    $region17: #{tpu_custom_call.1} parent=1 // pred_fallthru
      _
    // Predicated region
    $region18: #{tpu_custom_call.1} parent=1 // pred_check
      _
    $region19: #{tpu_custom_call.1} parent=1 // pred_check_branch
      %25 = sbr.rel (0) target = $region21
    $region20: #{tpu_custom_call.1} parent=1 // pred_region
      _
    $region21: #{tpu_custom_call.1} parent=1 // pred_fallthru
      _
    // Predicated region
    $region22: #{tpu_custom_call.1} parent=1 // pred_check
      _
    $region23: #{tpu_custom_call.1} parent=1 // pred_check_branch
      %27 = sbr.rel (0) target = $region25
    $region24: #{tpu_custom_call.1} parent=1 // pred_region
      _
    $region25: #{tpu_custom_call.1} parent=1 // pred_fallthru
      _
    %p28 = scmp.eq.s32.totalorder 0, 0
    // Predicated region
    $region26: #{tpu_custom_call.1} parent=1 // pred_check
      %p29 = pneg %p28
    $region27: #{tpu_custom_call.1} parent=1 // pred_check_branch
      %31 = sbr.rel (%p29) target = $region29
    $region28: #{tpu_custom_call.1} parent=1 // pred_region
      %s32 = scalar_lea.smem [#allocation2], 0
      %33 = sst [smem:[%s32]] 0.0
      %v34 = vld [vmem:[%s4] sm:$0x1]
      %v35 = vmax.f32 %v34, 0.0
      %v36 = vand.u32 2147483647, %v34
      %v37 = vsub.f32 0.0, %v36
      %v38 = vmul.f32 %v37, 1.442695
      %v39 = vpow.pop %v38
      %v40 = vadd.f32 %v39, 1.0
      %v41 = vlog2.pop %v40
      %v42 = vmul.f32 %v41, 0.6931472
      %v43 = vmul.f32 -0.5, %v39
      %v44 = vadd.f32 %v43, 1.0
      %v45 = vmul.f32 %v44, %v39
      %v46 = vand.u32 2147483647, %v39
      %vm47 = vcmp.lt.f32.partialorder %v46, 0.0004427343
      %v48 = vsel %vm47, %v45, %v42
      %v49 = vadd.f32 %v35, %v48
      %v50 = vld [vmem:[%s3] sm:$0x1]
      %v51 = vld [vmem:[%s5] sm:$0x1]
      %v52 = vmul.f32 %v51, %v49
      %v53 = vadd.f32 %v50, %v52
      %vm54 = vcmask 253952
      %55 = vst.msk [vmem:[#allocation3] sm:$0x1] %vm54, %v53
    $region29: #{tpu_custom_call.1} parent=1 // pred_fallthru
      _
    %v56 = vld [vmem:[%s0] sm:$0xff]
    %v57 = vld [vmem:[%s0 + $0x8] sm:$0xff]
    %v58 = vld [vmem:[%s0 + $0x10] sm:$0xff]
    %v59 = vld [vmem:[%s0 + $0x18] sm:$0xff]
    %v60 = vld [vmem:[%s1] sm:$0xff]
    %v61 = vld [vmem:[%s1 + $0x8] sm:$0xff]
    %v62 = vld [vmem:[%s1 + $0x10] sm:$0xff]
    %v63 = vld [vmem:[%s1 + $0x18] sm:$0xff]
    %v64 = vmax.f32 %v60, 0.0
    %v65 = vmax.f32 %v61, 0.0
    %v66 = vmax.f32 %v62, 0.0
    %v67 = vmax.f32 %v63, 0.0
    %v68 = vand.u32 2147483647, %v60
    %v69 = vand.u32 2147483647, %v61
    %v70 = vand.u32 2147483647, %v62
    %v71 = vand.u32 2147483647, %v63
    %v72 = vsub.f32 0.0, %v68
    %v73 = vsub.f32 0.0, %v69
    %v74 = vsub.f32 0.0, %v70
    %v75 = vsub.f32 0.0, %v71
    %v76 = vmul.f32 %v72, 1.442695
    %v77 = vpow.pop %v76
    %v78 = vmul.f32 %v73, 1.442695
    %v79 = vpow.pop %v78
    %v80 = vmul.f32 %v74, 1.442695
    %v81 = vpow.pop %v80
    %v82 = vmul.f32 %v75, 1.442695
    %v83 = vpow.pop %v82
    %v84 = vadd.f32 %v77, 1.0
    %v85 = vlog2.pop %v84
    %v86 = vmul.f32 %v85, 0.6931472
    %v87 = vmul.f32 -0.5, %v77
    %v88 = vadd.f32 %v87, 1.0
    %v89 = vmul.f32 %v88, %v77
    %v90 = vand.u32 2147483647, %v77
    %vm91 = vcmp.lt.f32.partialorder %v90, 0.0004427343
    %v92 = vsel %vm91, %v89, %v86
    %v93 = vadd.f32 %v79, 1.0
    %v94 = vlog2.pop %v93
    %v95 = vmul.f32 %v94, 0.6931472
    %v96 = vmul.f32 -0.5, %v79
    %v97 = vadd.f32 %v96, 1.0
    %v98 = vmul.f32 %v97, %v79
    %v99 = vand.u32 2147483647, %v79
    %vm100 = vcmp.lt.f32.partialorder %v99, 0.0004427343
    %v101 = vsel %vm100, %v98, %v95
    %v102 = vadd.f32 %v81, 1.0
    %v103 = vlog2.pop %v102
    %v104 = vmul.f32 %v103, 0.6931472
    %v105 = vmul.f32 -0.5, %v81
    %v106 = vadd.f32 %v105, 1.0
    %v107 = vmul.f32 %v106, %v81
    %v108 = vand.u32 2147483647, %v81
    %vm109 = vcmp.lt.f32.partialorder %v108, 0.0004427343
    %v110 = vsel %vm109, %v107, %v104
    %v111 = vadd.f32 %v83, 1.0
    %v112 = vlog2.pop %v111
    %v113 = vmul.f32 %v112, 0.6931472
    %v114 = vmul.f32 -0.5, %v83
    %v115 = vadd.f32 %v114, 1.0
    %v116 = vmul.f32 %v115, %v83
    %v117 = vand.u32 2147483647, %v83
    %vm118 = vcmp.lt.f32.partialorder %v117, 0.0004427343
    %v119 = vsel %vm118, %v116, %v113
    %v120 = vadd.f32 %v64, %v92
    %v121 = vadd.f32 %v65, %v101
    %v122 = vadd.f32 %v66, %v110
    %v123 = vadd.f32 %v67, %v119
    %v124 = vld [vmem:[%s2] sm:$0xff]
    %v125 = vld [vmem:[%s2 + $0x8] sm:$0xff]
    %v126 = vld [vmem:[%s2 + $0x10] sm:$0xff]
    %v127 = vld [vmem:[%s2 + $0x18] sm:$0xff]
    %v128 = vmul.f32 %v124, %v120
    %v129 = vmul.f32 %v125, %v121
    %v130 = vmul.f32 %v126, %v122
    %v131 = vmul.f32 %v127, %v123
    %v132 = vadd.f32 %v56, %v128
    %v133 = vadd.f32 %v57, %v129
    %v134 = vadd.f32 %v58, %v130
    %v135 = vadd.f32 %v59, %v131
    %vm136 = vcmask 130048
    %137 = vst.msk [vmem:[%s6] sm:$0xff] %vm136, %v132
    %138 = vst.msk [vmem:[%s6 + $0x8] sm:$0xff] %vm136, %v133
    %139 = vst.msk [vmem:[%s6 + $0x10] sm:$0xff] %vm136, %v134
    %140 = vst.msk [vmem:[%s6 + $0x18] sm:$0xff] %vm136, %v135
    %vm141 = vcmp.lt.f32.partialorder %v60, -20.0
    %vm142 = vcmp.lt.f32.partialorder %v61, -20.0
    %vm143 = vcmp.lt.f32.partialorder %v62, -20.0
    %vm144 = vcmp.lt.f32.partialorder %v63, -20.0
    %v145 = vlog2.pop %v120
    %v146 = vmul.f32 %v145, 0.6931472
    %v147 = vlog2.pop %v121
    %v148 = vmul.f32 %v147, 0.6931472
    %v149 = vlog2.pop %v122
    %v150 = vmul.f32 %v149, 0.6931472
    %v151 = vlog2.pop %v123
    %v152 = vmul.f32 %v151, 0.6931472
    %v153 = vsel %vm141, %v60, %v146
    %v154 = vsel %vm142, %v61, %v148
    %v155 = vsel %vm143, %v62, %v150
    %v156 = vsel %vm144, %v63, %v152
    %s157 = sld [smem:[#allocation2]]
    %v158 = vsub.f32 0.0, %v153
    %v159 = vsub.f32 0.0, %v154
    %v160 = vsub.f32 0.0, %v155
    %v161 = vsub.f32 0.0, %v156
    %v162 = vmul.f32 %v120, %v120
    %v163 = vmul.f32 %v121, %v121
    %v164 = vmul.f32 %v122, %v122
    %v165 = vmul.f32 %v123, %v123
    %v166 = vmul.f32 %v56, %v56
    %v167 = vmul.f32 %v57, %v57
    %v168 = vmul.f32 %v58, %v58
    %v169 = vmul.f32 %v59, %v59
    %v170 = vadd.f32 %v162, %v166
    %v171 = vadd.f32 %v163, %v167
    %v172 = vadd.f32 %v164, %v168
    %v173 = vadd.f32 %v165, %v169
    %v174 = vmul.f32 %v170, 0.5
    %v175 = vmul.f32 %v171, 0.5
    %v176 = vmul.f32 %v172, 0.5
    %v177 = vmul.f32 %v173, 0.5
    %v178 = vadd.f32 %v158, %v174
    %v179 = vadd.f32 %v159, %v175
    %v180 = vadd.f32 %v160, %v176
    %v181 = vadd.f32 %v161, %v177
    %v182 = vsub.f32 %v178, 0.5
    %v183 = vsub.f32 %v179, 0.5
    %v184 = vsub.f32 %v180, 0.5
    %v185 = vsub.f32 %v181, 0.5
    %v186 = vsel %vm136, %v182, 0.0
    %v187 = vsel %vm136, %v183, 0.0
    %v188 = vadd.f32 %v186, %v187
    %v189 = vsel %vm136, %v184, 0.0
    %v190 = vadd.f32 %v188, %v189
    %v191 = vsel %vm136, %v185, 0.0
    %v192 = vadd.f32 %v190, %v191
    %193 = vadd.xlane.f32.xlu0 %v192
    %v194 = vpop.xlane.xlu0 %193
    %v195 = vrot.slane %v194, 4
    %v196 = vadd.f32 %v194, %v195
    %v197 = vrot.slane %v196, 2
    %v198 = vadd.f32 %v196, %v197
    %v199 = vrot.slane %v198, 1
    %v200 = vadd.f32 %v198, %v199
    %s201 = vtos %v200
    %s202 = sadd.f32 %s157, %s201
    %s203 = scalar_lea.smem [#allocation2], 0
    %204 = sst [smem:[%s203]] %s202
    // Predicated region
    $region30: #{tpu_custom_call.1} parent=1 // pred_check
      %p205 = pneg %p28
    $region31: #{tpu_custom_call.1} parent=1 // pred_check_branch
      %207 = sbr.rel (%p205) target = $region33
    $region32: #{tpu_custom_call.1} parent=1 // pred_region
      %s208 = sld [smem:[#allocation2]]
      %s209 = scalar_lea.smem [#allocation6], 0
      %210 = sst [smem:[%s209]] %s208
    $region33: #{tpu_custom_call.1} parent=1 // pred_fallthru
      _
    // Predicated region
    $region34: #{tpu_custom_call.1} parent=1 // pred_check
      _
    $region35: #{tpu_custom_call.1} parent=1 // pred_check_branch
      %212 = sbr.rel (0) target = $region37
    $region36: #{tpu_custom_call.1} parent=1 // pred_region
      _
    $region37: #{tpu_custom_call.1} parent=1 // pred_fallthru
      _
    // Predicated region
    $region38: #{tpu_custom_call.1} parent=1 // pred_check
      _
    $region39: #{tpu_custom_call.1} parent=1 // pred_check_branch
      %214 = sbr.rel (0) target = $region41
    $region40: #{tpu_custom_call.1} parent=1 // pred_region
      %216 = vsyncadd [#allocation4], 0
      %s218 = sshll.u32 [#allocation3], 4
      %s219 = int_to_ptr.vmem [resolvable:$true] %s218
      %s220 = sshll.u32 %s7, 4
      %s221 = int_to_ptr.hbm [resolvable:$true] %s220
      %223 = dma.vmem_to_hbm [thread:$0]  %s219, 16, %s221, [#allocation4]
    $region41: #{tpu_custom_call.1} parent=1 // pred_fallthru
      _
    // Predicated region
    $region42: #{tpu_custom_call.1} parent=1 // pred_check
      _
    $region43: #{tpu_custom_call.1} parent=1 // pred_check_branch
      %225 = sbr.rel (0) target = $region45
    $region44: #{tpu_custom_call.1} parent=1 // pred_region
      %227 = vsyncadd [#allocation5], 0
      %s229 = sshll.u32 %s8, 4
      %s230 = int_to_ptr.hbm [resolvable:$true] %s229
      %232 = dma.smem_to_hbm [#allocation6], 16, %s230, [#allocation5]
    $region45: #{tpu_custom_call.1} parent=1 // pred_fallthru
      _
    // Predicated region
    $region46: #{tpu_custom_call.1} parent=1 // pred_check
      _
    $region47: #{tpu_custom_call.1} parent=1 // pred_check_branch
      %234 = sbr.rel (0) target = $region49
    $region48: #{tpu_custom_call.1} parent=1 // pred_region
      _
    $region49: #{tpu_custom_call.1} parent=1 // pred_fallthru
      _
    // Predicated region
    $region50: #{tpu_custom_call.1} parent=1 // pred_check
      _
    $region51: #{tpu_custom_call.1} parent=1 // pred_check_branch
      %236 = sbr.rel (0) target = $region53
    $region52: #{tpu_custom_call.1} parent=1 // pred_region
      %238 = dma.done [#allocation4], 16
    $region53: #{tpu_custom_call.1} parent=1 // pred_fallthru
      _
    // Predicated region
    $region54: #{tpu_custom_call.1} parent=1 // pred_check
      _
    $region55: #{tpu_custom_call.1} parent=1 // pred_check_branch
      %240 = sbr.rel (0) target = $region57
    $region56: #{tpu_custom_call.1} parent=1 // pred_region
      %242 = dma.done [#allocation5], 16
    $region57: #{tpu_custom_call.1} parent=1 // pred_fallthru
      _
    %243 = sfence
    %244 = vsyncpa [#allocation4], 1
    %245 = vsyncpa [#allocation5], 1

</llo_original>
